<compile_context>
chip_gen: v7x
topology: tpu7x:2x2x1
jax: 0.10.0
libtpu: 0.0.40
codegen_flags: <defaults>
</compile_context>

<pallas_src>
import jax
import jax.numpy as jnp
from jax import lax
from jax.experimental import pallas as pl
from jax.experimental.pallas import tpu as pltpu


NEG_SLOPE = 0.01  # PyTorch nn.LeakyReLU default


def _leaky_relu(y):
    return jnp.where(y > 0, y, NEG_SLOPE * y)


# ---------------------------------------------------------------------------
# Pass 1: accumulate channel-attention logits over N tiles, softmax at the end.
# ---------------------------------------------------------------------------
def cam_attn_kernel(x_ref, w12_ref, b12_ref, a_ref):
    n = pl.program_id(1)
    C = a_ref.shape[1]

    @pl.when(n == 0)
    def _init():
        a_ref[0] = jnp.zeros((C, C), a_ref.dtype)

    xt = x_ref[0]                                            # (C, tn) f32
    # Fused conv1+conv2: one MXU pass over the tile instead of two.
    y12 = jnp.dot(w12_ref[...], xt, preferred_element_type=jnp.float32)  # (2C, tn)
    y12 = _leaky_relu(y12 + b12_ref[...])                    # bias (2C,1) broadcasts
    x1 = y12[:C]                                             # (C, tn)
    x2 = y12[C:]                                             # (C, tn)

    # A[c, s] += sum_n x1[c, n] * x2[s, n]  (per-tile contraction; the implied
    # transpose is only a (tn, C) slab and hides under the MXU).
    a_ref[0] += lax.dot_general(
        x1, x2,
        dimension_numbers=(((1,), (1,)), ((), ())),
        preferred_element_type=jnp.float32)

    @pl.when(n == pl.num_programs(1) - 1)
    def _softmax():
        a = a_ref[0]
        a = a - jnp.max(a, axis=0, keepdims=True)            # softmax over channel c
        e = jnp.exp(a)
        inv = pl.reciprocal(jnp.sum(e, axis=0, keepdims=True), approx=True)
        a_ref[0] = e * inv


# ---------------------------------------------------------------------------
# Pass 2: per N tile, apply attention + conv3/conv4 + residual (bf16 value path).
# ---------------------------------------------------------------------------
def cam_apply_kernel(x_ref, a_ref, w34_ref, b34_ref, o_ref):
    C = a_ref.shape[1]

    xt = x_ref[0].astype(jnp.bfloat16)                       # (C, tn)
    w34 = w34_ref[...]                                       # (2C, C) bf16
    b34 = b34_ref[...]                                       # (2C, 1) f32

    # conv3 (recomputed here instead of round-tripping x3 through HBM)
    x3 = jnp.dot(w34[:C], xt, preferred_element_type=jnp.float32)
    x3 = _leaky_relu(x3 + b34[:C])                           # (C, tn) f32

    # out[s, n] = sum_c a[c, s] * x3[c, n]
    a = a_ref[0].astype(jnp.bfloat16)                        # (C, C)
    out = lax.dot_general(
        a, x3.astype(jnp.bfloat16),
        dimension_numbers=(((0,), (0,)), ((), ())),
        preferred_element_type=jnp.float32)                  # (C, tn)

    # conv4 + LeakyReLU
    y = jnp.dot(w34[C:], out.astype(jnp.bfloat16), preferred_element_type=jnp.float32)
    y = _leaky_relu(y + b34[C:])

    # Residual: re-read x from the VMEM ref right before the add (keeps it off
    # the live set during the matmuls).
    o_ref[0] = (y + x_ref[0]).astype(o_ref.dtype)


# ---------------------------------------------------------------------------
# Wrapper
# ---------------------------------------------------------------------------
def _pick_tile_n(N, max_tile=2048):
    """Largest multiple of 128 that divides N and is <= max_tile; else full N."""
    best = N  # block == full dim is always a legal block shape
    t = 128
    while t <= min(N, max_tile):
        if N % t == 0:
            best = t
        t += 128
    # TODO(synk): mask ragged tail tiles instead of falling back to tile_n = N
    # when N has no 128-multiple divisor.
    return best


def cam_forward(x_nchw, params, *, max_tile_n=2048):
    """x_nchw: (B, C, H, W) float32. params: w1..w4 (C,C), b1..b4 (C,)."""
    B, C, H, W = x_nchw.shape
    N = H * W
    x = x_nchw.reshape(B, C, N)

    tn = _pick_tile_n(N, max_tile_n)
    n_tiles = N // tn

    # Fused operands: fewer BlockSpecs / pipeline buffers per grid step.
    w12 = jnp.concatenate([params["w1"], params["w2"]], axis=0)                     # (2C, C) f32
    b12 = jnp.concatenate([params["b1"], params["b2"]], axis=0).reshape(2 * C, 1)   # (2C, 1) f32
    w34 = jnp.concatenate([params["w3"], params["w4"]], axis=0).astype(jnp.bfloat16)  # (2C, C)
    b34 = jnp.concatenate([params["b3"], params["b4"]], axis=0).reshape(2 * C, 1)   # (2C, 1) f32

    x_spec = pl.BlockSpec((1, C, tn), lambda b, n: (b, 0, n))
    a_spec = pl.BlockSpec((1, C, C), lambda b, n: (b, 0, 0))
    w_spec = pl.BlockSpec((2 * C, C), lambda b, n: (0, 0))
    bias_spec = pl.BlockSpec((2 * C, 1), lambda b, n: (0, 0))

    vmem_limit = 32 * 1024 * 1024  # explicit; well inside v7x's 64 MiB physical VMEM

    # Pass 1: channel-attention matrix (B, C, C), softmaxed over the c axis.
    attn = pl.pallas_call(
        cam_attn_kernel,
        out_shape=jax.ShapeDtypeStruct((B, C, C), jnp.float32),
        grid_spec=pltpu.PrefetchScalarGridSpec(
            num_scalar_prefetch=0,
            grid=(B, n_tiles),
            in_specs=[x_spec, w_spec, bias_spec],
            out_specs=a_spec,
        ),
        compiler_params=pltpu.CompilerParams(
            dimension_semantics=("parallel", "arbitrary"),
            vmem_limit_bytes=vmem_limit),
    )(x, w12, b12)

    # Pass 2: apply attention, conv4, residual — fully parallel over (B, N tiles).
    out = pl.pallas_call(
        cam_apply_kernel,
        out_shape=jax.ShapeDtypeStruct((B, C, N), x.dtype),
        grid_spec=pltpu.PrefetchScalarGridSpec(
            num_scalar_prefetch=0,
            grid=(B, n_tiles),
            in_specs=[x_spec, a_spec, w_spec, bias_spec],
            out_specs=x_spec,
        ),
        compiler_params=pltpu.CompilerParams(
            dimension_semantics=("parallel", "parallel"),
            vmem_limit_bytes=vmem_limit),
    )(x, attn, w34, b34)

    return out.reshape(B, C, H, W)


# ---------------------------------------------------------------------------
# Plain-JAX reference (mirrors the PyTorch forward, all f32)
# ---------------------------------------------------------------------------
def cam_reference(x_nchw, params):
    B, C, H, W = x_nchw.shape
    N = H * W
    x = x_nchw.reshape(B, C, N)

    def conv1x1(w, b, inp):
        y = jnp.einsum("oc,bcn->bon", w, inp) + b[None, :, None]
        return jnp.where(y > 0, y, NEG_SLOPE * y)

    x1 = conv1x1(params["w1"], params["b1"], x)
    x2 = conv1x1(params["w2"], params["b2"], x)
    x3 = conv1x1(params["w3"], params["b3"], x)
    a = jnp.einsum("bcn,bsn->bcs", x1, x2)
    a = jax.nn.softmax(a, axis=1)
    out = jnp.einsum("bcn,bcs->bsn", x3, a)
    out = conv1x1(params["w4"], params["b4"], out) + x
    return out.reshape(B, C, H, W)


def make_params(key, C):
    ks = jax.random.split(key, 8)
    scale = 1.0 / jnp.sqrt(C)  # fan_in = C for a 1x1 conv
    return {
        "w1": jax.random.uniform(ks[0], (C, C), jnp.float32, -scale, scale),
        "b1": jax.random.uniform(ks[1], (C,), jnp.float32, -scale, scale),
        "w2": jax.random.uniform(ks[2], (C, C), jnp.float32, -scale, scale),
        "b2": jax.random.uniform(ks[3], (C,), jnp.float32, -scale, scale),
        "w3": jax.random.uniform(ks[4], (C, C), jnp.float32, -scale, scale),
        "b3": jax.random.uniform(ks[5], (C,), jnp.float32, -scale, scale),
        "w4": jax.random.uniform(ks[6], (C, C), jnp.float32, -scale, scale),
        "b4": jax.random.uniform(ks[7], (C,), jnp.float32, -scale, scale),
    }


if __name__ == "__main__":
    key = jax.random.PRNGKey(0)
    k_x, k_p = jax.random.split(key)

    B, C, H, W = 2, 8, 16, 16   # small shapes; C=8 / N=256 align with (8,128) tiling
    x = jax.random.normal(k_x, (B, C, H, W), jnp.float32)
    params = make_params(k_p, C)

    out = jax.block_until_ready(cam_forward(x, params))
    ref = cam_reference(x, params)

    assert out.shape == (B, C, H, W)
    # Value path (conv3 / attention-apply / conv4) uses bf16 MXU operands, so the
    # tolerance is relaxed vs. the f32 reference; logit/softmax path stays f32.
    assert jnp.allclose(out, ref, atol=5e-2, rtol=5e-2), \
        f"max abs diff {jnp.max(jnp.abs(out - ref))}"

    print("KERNEL_OK")
</pallas_src>

<mosaic_0001>
module attributes {stable_mosaic.version = 11 : i64} {
  func.func @cam_attn_kernel(%arg0: i32, %arg1: i32, %arg2: memref<1x8x256xf32, #tpu.memory_space<vmem>>, %arg3: memref<16x8xf32, #tpu.memory_space<vmem>>, %arg4: memref<16x1xf32, #tpu.memory_space<vmem>>, %arg5: memref<1x8x8xf32, #tpu.memory_space<vmem>>) attributes {dimension_semantics = [#tpu.dimension_semantics<parallel>, #tpu.dimension_semantics<arbitrary>], iteration_bounds = array<i64: 2, 1>, scalar_prefetch = 0 : i64, scratch_operands = 0 : i64, tpu.core_type = #tpu.core_type<tc>, window_params = [{transform_indices = @transform_0, window_bounds = array<i64: 1, 8, 256>}, {pipeline_mode = #tpu.pipeline_mode<synchronous>, transform_indices = @transform_1, window_bounds = array<i64: 16, 8>}, {pipeline_mode = #tpu.pipeline_mode<synchronous>, transform_indices = @transform_2, window_bounds = array<i64: 16, 1>}, {transform_indices = @transform_3, window_bounds = array<i64: 1, 8, 8>}]} {
    %c0_i32 = arith.constant 0 : i32
    %0 = arith.cmpi eq, %arg1, %c0_i32 : i32
    %1 = arith.extui %0 : i1 to i32
    %c0_i32_0 = arith.constant 0 : i32
    %2 = arith.cmpi ne, %1, %c0_i32_0 : i32
    scf.if %2 {
      %cst_18 = arith.constant 0.000000e+00 : f32
      %27 = vector.broadcast %cst_18 : f32 to vector<8x8xf32>
      %c0_19 = arith.constant 0 : index
      %c0_20 = arith.constant 0 : index
      %c0_21 = arith.constant 0 : index
      %28 = vector.load %arg5[%c0_19, %c0_20, %c0_21] : memref<1x8x8xf32, #tpu.memory_space<vmem>>, vector<1x8x8xf32>
      %29 = vector.shape_cast %28 : vector<1x8x8xf32> to vector<8x8xf32>
      %30 = vector.shape_cast %27 : vector<8x8xf32> to vector<1x8x8xf32>
      tpu.vector_store %arg5[%c0_19, %c0_20, %c0_21], %30 {strides = array<i32>} : memref<1x8x8xf32, #tpu.memory_space<vmem>>, vector<1x8x8xf32>,
    } else {
    }
    %c0 = arith.constant 0 : index
    %c0_1 = arith.constant 0 : index
    %c0_2 = arith.constant 0 : index
    %3 = vector.load %arg2[%c0, %c0_1, %c0_2] : memref<1x8x256xf32, #tpu.memory_space<vmem>>, vector<1x8x256xf32>
    %4 = vector.shape_cast %3 : vector<1x8x256xf32> to vector<8x256xf32>
    %c0_3 = arith.constant 0 : index
    %c0_4 = arith.constant 0 : index
    %5 = vector.load %arg3[%c0_3, %c0_4] : memref<16x8xf32, #tpu.memory_space<vmem>>, vector<16x8xf32>
    %cst = arith.constant dense<0.000000e+00> : vector<16x256xf32>
    %6 = tpu.matmul %5, %4, %cst {dimension_numbers = #tpu.dot_dimension_numbers<[1], [0], [0], [1], [0, 0, 1, 1], [], []>} : vector<16x8xf32>, vector<8x256xf32>, vector<16x256xf32> -> vector<16x256xf32>
    %c0_5 = arith.constant 0 : index
    %c0_6 = arith.constant 0 : index
    %7 = vector.load %arg4[%c0_5, %c0_6] : memref<16x1xf32, #tpu.memory_space<vmem>>, vector<16x1xf32>
    %8 = vector.broadcast %7 : vector<16x1xf32> to vector<16x256xf32>
    %9 = arith.addf %6, %8 : vector<16x256xf32>
    %cst_7 = arith.constant 0.000000e+00 : f32
    %10 = vector.broadcast %cst_7 : f32 to vector<16x256xf32>
    %11 = arith.cmpf ogt, %9, %10 : vector<16x256xf32>
    %cst_8 = arith.constant 0.00999999977 : f32
    %12 = vector.broadcast %cst_8 : f32 to vector<16x256xf32>
    %13 = arith.mulf %12, %9 : vector<16x256xf32>
    %14 = arith.select %11, %9, %13 : vector<16x256xi1>, vector<16x256xf32>
    %15 = vector.extract_strided_slice %14 {offsets = [0, 0], sizes = [8, 256], strides = [1, 1]} : vector<16x256xf32> to vector<8x256xf32>
    %16 = vector.extract_strided_slice %14 {offsets = [8, 0], sizes = [8, 256], strides = [1, 1]} : vector<16x256xf32> to vector<8x256xf32>
    %c0_9 = arith.constant 0 : index
    %c0_10 = arith.constant 0 : index
    %c0_11 = arith.constant 0 : index
    %17 = vector.load %arg5[%c0_9, %c0_10, %c0_11] : memref<1x8x8xf32, #tpu.memory_space<vmem>>, vector<1x8x8xf32>
    %18 = vector.shape_cast %17 : vector<1x8x8xf32> to vector<8x8xf32>
    %cst_12 = arith.constant dense<0.000000e+00> : vector<8x8xf32>
    %19 = tpu.matmul %15, %16, %cst_12 {dimension_numbers = #tpu.dot_dimension_numbers<[1], [1], [0], [0], [0, 0, 1, 0], [], []>} : vector<8x256xf32>, vector<8x256xf32>, vector<8x8xf32> -> vector<8x8xf32>
    %20 = arith.addf %18, %19 : vector<8x8xf32>
    %c0_13 = arith.constant 0 : index
    %c0_14 = arith.constant 0 : index
    %c0_15 = arith.constant 0 : index
    %21 = vector.load %arg5[%c0_13, %c0_14, %c0_15] : memref<1x8x8xf32, #tpu.memory_space<vmem>>, vector<1x8x8xf32>
    %22 = vector.shape_cast %21 : vector<1x8x8xf32> to vector<8x8xf32>
    %23 = vector.shape_cast %20 : vector<8x8xf32> to vector<1x8x8xf32>
    tpu.vector_store %arg5[%c0_13, %c0_14, %c0_15], %23 {strides = array<i32>} : memref<1x8x8xf32, #tpu.memory_space<vmem>>, vector<1x8x8xf32>,
    %c0_i32_16 = arith.constant 0 : i32
    %24 = arith.cmpi eq, %arg1, %c0_i32_16 : i32
    %25 = arith.extui %24 : i1 to i32
    %c0_i32_17 = arith.constant 0 : i32
    %26 = arith.cmpi ne, %25, %c0_i32_17 : i32
    scf.if %26 {
      %c0_18 = arith.constant 0 : index
      %c0_19 = arith.constant 0 : index
      %c0_20 = arith.constant 0 : index
      %27 = vector.load %arg5[%c0_18, %c0_19, %c0_20] : memref<1x8x8xf32, #tpu.memory_space<vmem>>, vector<1x8x8xf32>
      %28 = vector.shape_cast %27 : vector<1x8x8xf32> to vector<8x8xf32>
      %cst_21 = arith.constant dense<0xFF800000> : vector<8xf32>
      %29 = vector.multi_reduction <maximumf>, %28, %cst_21 [0] : vector<8x8xf32> to vector<8xf32>
      %30 = vector.shape_cast %29 : vector<8xf32> to vector<1x8xf32>
      %31 = vector.broadcast %30 : vector<1x8xf32> to vector<8x8xf32>
      %32 = arith.subf %28, %31 : vector<8x8xf32>
      %33 = math.exp %32 : vector<8x8xf32>
      %cst_22 = arith.constant dense<0.000000e+00> : vector<8xf32>
      %34 = vector.multi_reduction <add>, %33, %cst_22 [0] : vector<8x8xf32> to vector<8xf32>
      %35 = vector.shape_cast %34 : vector<8xf32> to vector<1x8xf32>
      %36 = tpu.reciprocal %35 {approx = true} : vector<1x8xf32> -> vector<1x8xf32>
      %37 = vector.broadcast %36 : vector<1x8xf32> to vector<8x8xf32>
      %38 = arith.mulf %33, %37 : vector<8x8xf32>
      %c0_23 = arith.constant 0 : index
      %c0_24 = arith.constant 0 : index
      %c0_25 = arith.constant 0 : index
      %39 = vector.load %arg5[%c0_23, %c0_24, %c0_25] : memref<1x8x8xf32, #tpu.memory_space<vmem>>, vector<1x8x8xf32>
      %40 = vector.shape_cast %39 : vector<1x8x8xf32> to vector<8x8xf32>
      %41 = vector.shape_cast %38 : vector<8x8xf32> to vector<1x8x8xf32>
      tpu.vector_store %arg5[%c0_23, %c0_24, %c0_25], %41 {strides = array<i32>} : memref<1x8x8xf32, #tpu.memory_space<vmem>>, vector<1x8x8xf32>,
    } else {
    }
    return
  }
  func.func @transform_0(%arg0: i32, %arg1: i32) -> (i32, i32, i32) {
    %c0_i32 = arith.constant 0 : i32
    %c0_i32_0 = arith.constant 0 : i32
    return %arg0, %c0_i32, %arg1 : i32, i32, i32
  }
  func.func @transform_1(%arg0: i32, %arg1: i32) -> (i32, i32) {
    %c0_i32 = arith.constant 0 : i32
    %c0_i32_0 = arith.constant 0 : i32
    %c0_i32_1 = arith.constant 0 : i32
    return %c0_i32, %c0_i32_0 : i32, i32
  }
  func.func @transform_2(%arg0: i32, %arg1: i32) -> (i32, i32) {
    %c0_i32 = arith.constant 0 : i32
    %c0_i32_0 = arith.constant 0 : i32
    %c0_i32_1 = arith.constant 0 : i32
    return %c0_i32, %c0_i32_0 : i32, i32
  }
  func.func @transform_3(%arg0: i32, %arg1: i32) -> (i32, i32, i32) {
    %c0_i32 = arith.constant 0 : i32
    %c0_i32_0 = arith.constant 0 : i32
    %c0_i32_1 = arith.constant 0 : i32
    return %arg0, %c0_i32, %c0_i32_0 : i32, i32, i32
  }
}

</mosaic_0001>

<llo_original>
// kernel: tpu_custom_call.1
$region0: #{tpu_custom_call.1}
  #allocation0 [shape = 'u32[]', space=smem, size = 0x4, offset = 0x4, fixed_abs, tag = 'smem constant byte address 0x4 - core index']
  #allocation1 [shape = 'u32[144,128]{1,0:T(1,128)}', space=vmem, size = 0x12000, scoped, tag = 'internal scratch']
  %s0 = inlined_call_operand.vmem [shape: f32[2,8,256], index: 0, kind: input, shape index: {}]
  %s1 = inlined_call_operand.vmem [shape: f32[16,8], index: 1, kind: input, shape index: {}]
  %s2 = inlined_call_operand.vmem [shape: f32[16,1], index: 2, kind: input, shape index: {}]
  %s3 = inlined_call_operand.hbm [shape: f32[2,8,8], index: 3, kind: output, shape index: {}]
  %s4 = sld [smem:[#allocation0]]
  $region53: #{tpu_custom_call.1} parent=0
    _
  %s6 = ssub.s32 1, %s4
  %s7 = scalar_select 0, %s6, %s4
  $region1: #{tpu_custom_call.1} parent=0
    #allocation2 [shape = 'u8[8192]{0}', space=vmem, size = 0x2000, scoped, tag = 'output window, operand 0']
    #allocation3 [shape = 's32[2]{0}', space=sflag, size = 0x8, scoped, tag = 'scoped memory for tpu_custom_call.1']
    %8 = vsyncpa [#allocation3], 0
    %s9 = scalar_lea.sflag [#allocation3], 1
    %10 = vsyncpa %s9, 0
    loop: start=0, step=1, limit=4
    $region2: #{tpu_custom_call.1} parent=1 // loop_pre_header
      _
    $region3: #{tpu_custom_call.1} parent=1 // loop_header
      %s12 = sphi 0, %s16
      %p13 = scmp.ge.s32.totalorder %s12, 4
      %s19 = sphi 0, %s31
      %s20 = sphi 0, %s27
      %s21 = sphi 0, %s19
      %s22 = sphi 0, %s20
      %s23 = sphi 0, %s21
      %s24 = sphi 0, %s22
      %s36 = sphi 0, %s38
      %s39 = sphi 0, %s36
      %s40 = sphi 0, %s39
      %s56 = sphi 0, %s40
      %s60 = sphi 0, %s60
      %s62 = sphi 0, %s60
      %s63 = sphi 0, %s62
      %s77 = sphi 0, %s63
      %s81 = sphi 0, %s81
      %s83 = sphi 0, %s81
      %s84 = sphi 0, %s83
      %s98 = sphi 0, %s84
      %s104 = sphi 0, %s106
      %s107 = sphi 0, %s104
      %s108 = sphi 0, %s107
      %s124 = sphi 0, %s108
    $region4: #{tpu_custom_call.1} parent=1 // loop_header_branch
      %15 = sbr.rel (%p13) target = $region8
    $region5: #{tpu_custom_call.1} parent=1 // loop_body
      %s17 = ssub.s32 %s12, 1
      %s18 = ssub.s32 %s12, 2
      %s25 = sadd.s32 1, %s20
      %p26 = scmp.ge.s32.totalorder %s25, 1
      %s27 = scalar_select %p26, 0, %s25
      %s28 = sadd.s32 1, %s19
      %s29 = scalar_select %p26, %s28, %s19
      %p30 = scmp.ge.s32.totalorder %s29, 2
      %s31 = scalar_select %p30, 0, %s29
      %s32 = ssub.s32 %s19, %s31
      %s33 = ssub.s32 %s20, %s27
      %s34 = sor.u32 %s32, %s33
      %p35 = scmp.eq.s32.totalorder %s34, 0
      %s37 = sadd.s32 %s36, 1
      %s38 = scalar_select %p35, %s36, %s37
      %p41 = pneg %p35
      %p42 = scmp.eq.s32.totalorder %s12, 1
      %p43 = por %p41, %p42
      %p44 = scmp.ne.s32.totalorder %s36, %s39
      %p45 = scmp.eq.s32.totalorder %s12, 0
      %p46 = por %p44, %p45
      %p47 = scmp.ne.s32.totalorder %s36, %s39
      %p48 = scmp.eq.s32.totalorder %s17, 1
      %p49 = por %p47, %p48
      %p50 = scmp.ne.s32.totalorder %s39, %s40
      %p51 = scmp.eq.s32.totalorder %s17, 0
      %p52 = por %p50, %p51
      %p53 = scmp.ne.s32.totalorder %s39, %s40
      %p54 = scmp.eq.s32.totalorder %s18, 1
      %p55 = por %p53, %p54
      %p57 = scmp.ne.s32.totalorder %s40, %s56
      %p58 = scmp.eq.s32.totalorder %s18, 0
      %p59 = por %p57, %p58
      %s61 = sadd.s32 %s60, 1
      %p64 = scmp.eq.s32.totalorder %s12, 1
      %p65 = scmp.ne.s32.totalorder %s60, %s62
      %p66 = scmp.eq.s32.totalorder %s12, 0
      %p67 = por %p65, %p66
      %p68 = scmp.ne.s32.totalorder %s60, %s62
      %p69 = scmp.eq.s32.totalorder %s17, 1
      %p70 = por %p68, %p69
      %p71 = scmp.ne.s32.totalorder %s62, %s63
      %p72 = scmp.eq.s32.totalorder %s17, 0
      %p73 = por %p71, %p72
      %p74 = scmp.ne.s32.totalorder %s62, %s63
      %p75 = scmp.eq.s32.totalorder %s18, 1
      %p76 = por %p74, %p75
      %p78 = scmp.ne.s32.totalorder %s63, %s77
      %p79 = scmp.eq.s32.totalorder %s18, 0
      %p80 = por %p78, %p79
      %s82 = sadd.s32 %s81, 1
      %p85 = scmp.eq.s32.totalorder %s12, 1
      %p86 = scmp.ne.s32.totalorder %s81, %s83
      %p87 = scmp.eq.s32.totalorder %s12, 0
      %p88 = por %p86, %p87
      %p89 = scmp.ne.s32.totalorder %s81, %s83
      %p90 = scmp.eq.s32.totalorder %s17, 1
      %p91 = por %p89, %p90
      %p92 = scmp.ne.s32.totalorder %s83, %s84
      %p93 = scmp.eq.s32.totalorder %s17, 0
      %p94 = por %p92, %p93
      %p95 = scmp.ne.s32.totalorder %s83, %s84
      %p96 = scmp.eq.s32.totalorder %s18, 1
      %p97 = por %p95, %p96
      %p99 = scmp.ne.s32.totalorder %s84, %s98
      %p100 = scmp.eq.s32.totalorder %s18, 0
      %p101 = por %p99, %p100
      %s102 = ssub.s32 %s19, %s31
      %p103 = scmp.eq.s32.totalorder %s102, 0
      %s105 = sadd.s32 %s104, 1
      %s106 = scalar_select %p103, %s104, %s105
      %p109 = pneg %p103
      %p110 = scmp.eq.s32.totalorder %s12, 1
      %p111 = por %p109, %p110
      %p112 = scmp.ne.s32.totalorder %s104, %s107
      %p113 = scmp.eq.s32.totalorder %s12, 0
      %p114 = por %p112, %p113
      %p115 = scmp.ne.s32.totalorder %s104, %s107
      %p116 = scmp.eq.s32.totalorder %s17, 1
      %p117 = por %p115, %p116
      %p118 = scmp.ne.s32.totalorder %s107, %s108
      %p119 = scmp.eq.s32.totalorder %s17, 0
      %p120 = por %p118, %p119
      %p121 = scmp.ne.s32.totalorder %s107, %s108
      %p122 = scmp.eq.s32.totalorder %s18, 1
      %p123 = por %p121, %p122
      %p125 = scmp.ne.s32.totalorder %s108, %s124
      %p126 = scmp.eq.s32.totalorder %s18, 0
      %p127 = por %p125, %p126
      %p128 = scmp.le.s32.totalorder 1, %s12
      %p129 = scmp.lt.s32.totalorder %s12, 3
      %p130 = pnand %p128, %p129
      %p131 = pneg %p130
      // Predicated region
      $region9: #{tpu_custom_call.1} parent=5 // pred_check
        _
      $region10: #{tpu_custom_call.1} parent=5 // pred_check_branch
        %133 = sbr.rel (%p130) target = $region12
      $region11: #{tpu_custom_call.1} parent=5 // pred_region
        %s134 = ssub.s32 %s12, 1
        // Predicated region
        $region13: #{tpu_custom_call.1} parent=11 // pred_check
          %p135 = pneg %p73
        $region14: #{tpu_custom_call.1} parent=11 // pred_check_branch
          %137 = sbr.rel (%p135) target = $region16
        $region15: #{tpu_custom_call.1} parent=11 // pred_region
          _
        $region16: #{tpu_custom_call.1} parent=11 // pred_fallthru
          _
        // Predicated region
        $region17: #{tpu_custom_call.1} parent=11 // pred_check
          %p138 = pneg %p94
        $region18: #{tpu_custom_call.1} parent=11 // pred_check_branch
          %140 = sbr.rel (%p138) target = $region20
        $region19: #{tpu_custom_call.1} parent=11 // pred_region
          _
        $region20: #{tpu_custom_call.1} parent=11 // pred_fallthru
          _
      $region12: #{tpu_custom_call.1} parent=5 // pred_fallthru
        _
      %p141 = scmp.lt.s32.totalorder %s12, 2
      // Predicated region
      $region21: #{tpu_custom_call.1} parent=5 // pred_check
        %p142 = pneg %p141
      $region22: #{tpu_custom_call.1} parent=5 // pred_check_branch
        %144 = sbr.rel (%p142) target = $region24
      $region23: #{tpu_custom_call.1} parent=5 // pred_region
        // Predicated region
        $region25: #{tpu_custom_call.1} parent=23 // pred_check
          %p145 = pneg %p46
        $region26: #{tpu_custom_call.1} parent=23 // pred_check_branch
          %147 = sbr.rel (%p145) target = $region28
        $region27: #{tpu_custom_call.1} parent=23 // pred_region
          %s148 = smul.u32 2, %s20
          %p149 = scmp.lt.s32.totalorder %s19, 1
          %s150 = scalar_select %p149, %s19, 1
          %p151 = scmp.lt.s32.totalorder %s148, 1
          %s152 = scalar_select %p151, %s148, 1
          %s153 = smul.addr %s150, 2
          %s154 = sadd.s32 %s152, %s153
          %s155 = smul.addr %s154, 8
          %s156 = scalar_lea.vmem %s0, %s155
          %s157 = smul.u32 2, %s20
        $region28: #{tpu_custom_call.1} parent=23 // pred_fallthru
          _
      $region24: #{tpu_custom_call.1} parent=5 // pred_fallthru
        _
      %p158 = scmp.le.s32.totalorder 1, %s12
      %p159 = scmp.lt.s32.totalorder %s12, 3
      %p160 = pnand %p158, %p159
      %p161 = pneg %p160
      // Predicated region
      $region29: #{tpu_custom_call.1} parent=5 // pred_check
        _
      $region30: #{tpu_custom_call.1} parent=5 // pred_check_branch
        %163 = sbr.rel (%p160) target = $region32
      $region31: #{tpu_custom_call.1} parent=5 // pred_region
        %s164 = ssub.s32 %s12, 1
        %s165 = smul.u32 2, %s22
        %p166 = scmp.lt.s32.totalorder %s21, 1
        %s167 = scalar_select %p166, %s21, 1
        %p168 = scmp.lt.s32.totalorder %s165, 1
        %s169 = scalar_select %p168, %s165, 1
        %s170 = smul.addr %s167, 2
        %s171 = sadd.s32 %s169, %s170
        %s172 = smul.addr %s171, 8
        %s173 = scalar_lea.vmem %s0, %s172
        %p174 = pneg %p52
        %p175 = pneg %p49
        %p176 = pneg %p73
        %p177 = pneg %p70
        %p178 = pneg %p94
        %p179 = pneg %p91
        %p180 = pneg %p120
        %p181 = pneg %p117
        %s182 = sand.u32 %s107, 1
        %s183 = scalar_lea.sflag [#allocation3], %s182
        %s184 = sand.u32 %s107, 1
        %s185 = smul.addr %s184, 8
        %s186 = scalar_lea.vmem [#allocation2], %s185
        %s187 = smul.u32 2, %s22
        %p188 = scmp.lt.s32.totalorder %s21, 1
        %s189 = scalar_select %p188, %s21, 1
        %p190 = scmp.lt.s32.totalorder %s187, 1
        %s191 = scalar_select %p190, %s187, 1
        %s192 = smul.addr %s189, 2
        %s193 = sadd.s32 %s191, %s192
        %s194 = smul.addr %s193, 8
        %s195 = scalar_lea.vmem %s0, %s194
        %s196 = smul.u32 2, %s22
        %p197 = scmp.eq.s32.totalorder %s22, 0
        // Predicated region
        $region33: #{tpu_custom_call.1} parent=31 // pred_check
          %p198 = pneg %p197
        $region34: #{tpu_custom_call.1} parent=31 // pred_check_branch
          %200 = sbr.rel (%p198) target = $region36
        $region35: #{tpu_custom_call.1} parent=31 // pred_region
          %vm201 = vcmask 64512
          %202 = vst.msk [vmem:[%s186] sm:$0xff] %vm201, 0.0
        $region36: #{tpu_custom_call.1} parent=31 // pred_fallthru
          _
        %v203 = vld [vmem:[%s195] sm:$0xff]
        %v204 = vld [vmem:[%s195 + $0x8] sm:$0xff]
        %v205 = vld [vmem:[%s1] sm:$0xff]
        %v206 = vld [vmem:[%s1 + $0x8] sm:$0xff]
        %v207 = vld [vmem:[%s2] sm:$0xff]
        %v208 = vld [vmem:[%s2 + $0x8] sm:$0xff]
        %210 = vset.pattern.permute.xlu0 0
        %211 = vperm.xlu0 %210, %v207
        %v212 = vpop.permute.xlu0 %211
        %215 = vset.pattern.permute.xlu0 0
        %216 = vperm.xlu0 %215, %v208
        %v217 = vpop.permute.xlu0 %216
        %vm219 = vcmask 64512
        %v221 = vsel %vm219, %v205, 0
        %v224 = vsel %vm219, %v206, 0
        %226 = vmatprep.subr.mxu0 %v204
        %227 = vmatpush1.msra.mxu0 %v203
        %228 = vmatprep.subr.mxu0 0.0
        %229 = vmatpush1.msra.mxu0 0.0
        %230 = vmatprep.subr.mxu0 0.0
        %231 = vmatpush1.msra.mxu0 0.0
        %232 = vmatprep.subr.mxu0 0.0
        %233 = vmatpush1.msra.mxu0 0.0
        %234 = vmatprep.subr.mxu0 0.0
        %235 = vmatpush1.msra.mxu0 0.0
        %236 = vmatprep.subr.mxu0 0.0
        %237 = vmatpush1.msra.mxu0 0.0
        %238 = vmatprep.subr.mxu0 0.0
        %239 = vmatpush1.msra.mxu0 0.0
        %240 = vmatprep.subr.mxu0 0.0
        %241 = vmatpush1.msra.mxu0 0.0
        %242 = vmatprep.subr.mxu0 0.0
        %243 = vmatpush1.msra.mxu0 0.0
        %244 = vmatprep.subr.mxu0 0.0
        %245 = vmatpush1.msra.mxu0 0.0
        %246 = vmatprep.subr.mxu0 0.0
        %247 = vmatpush1.msra.mxu0 0.0
        %248 = vmatprep.subr.mxu0 0.0
        %249 = vmatpush1.msra.mxu0 0.0
        %250 = vmatprep.subr.mxu0 0.0
        %251 = vmatpush1.msra.mxu0 0.0
        %252 = vmatprep.subr.mxu0 0.0
        %253 = vmatpush1.msra.mxu0 0.0
        %254 = vmatprep.subr.mxu0 0.0
        %255 = vmatpush1.msra.mxu0 0.0
        %256 = vmatprep.subr.mxu0 0.0
        %257 = vmatpush1.msra.mxu0 0.0
        %258 = vmatprep.subr.mxu0 0.0
        %259 = vmatpush1.msra.mxu0 0.0
        %260 = vmatprep.subr.mxu0 0.0
        %261 = vmatpush1.msra.mxu0 0.0
        %262 = vmatprep.subr.mxu0 0.0
        %263 = vmatpush1.msra.mxu0 0.0
        %264 = vmatprep.subr.mxu0 0.0
        %265 = vmatpush1.msra.mxu0 0.0
        %266 = vmatprep.subr.mxu0 0.0
        %267 = vmatpush1.msra.mxu0 0.0
        %268 = vmatprep.subr.mxu0 0.0
        %269 = vmatpush1.msra.mxu0 0.0
        %270 = vmatprep.subr.mxu0 0.0
        %271 = vmatpush1.msra.mxu0 0.0
        %272 = vmatprep.subr.mxu0 0.0
        %273 = vmatpush1.msra.mxu0 0.0
        %274 = vmatprep.subr.mxu0 0.0
        %275 = vmatpush1.msra.mxu0 0.0
        %276 = vmatprep.subr.mxu0 0.0
        %277 = vmatpush1.msra.mxu0 0.0
        %278 = vmatprep.subr.mxu0 0.0
        %279 = vmatpush1.msra.mxu0 0.0
        %280 = vmatprep.subr.mxu0 0.0
        %281 = vmatpush1.msra.mxu0 0.0
        %282 = vmatprep.subr.mxu0 0.0
        %283 = vmatpush1.msra.mxu0 0.0
        %284 = vmatprep.subr.mxu0 0.0
        %285 = vmatpush1.msra.mxu0 0.0
        %286 = vmatprep.subr.mxu0 0.0
        %287 = vmatpush1.msra.mxu0 0.0
        %288 = vmatprep.subr.mxu0 0.0
        %289 = vmatpush1.msra.mxu0 0.0
        %290 = vmatprep.mubr.f32.mxu0 0.0
        %291 = vmatmul.mubr.f32.gmra.mrb[0].mxu0 %v221
        %v292 = vpop.f32.mrb[0].mxu0
        %v293 = vadd.f32 %v212, %v292
        %v294 = vpop.f32.mrb[0].mxu0
        %v295 = vadd.f32 %v212, %v294
        %296 = vmatprep.mubr.f32.mxu0 0.0
        %297 = vmatmul.mubr.f32.gmra.mrb[0].mxu0 %v224
        %v298 = vpop.f32.mrb[0].mxu0
        %v299 = vadd.f32 %v217, %v298
        %v300 = vpop.f32.mrb[0].mxu0
        %v301 = vadd.f32 %v217, %v300
        %302 = vdwg.mxu0
        %vm303 = vcmp.gt.f32.partialorder %v293, 0.0
        %vm304 = vcmp.gt.f32.partialorder %v295, 0.0
        %vm305 = vcmp.gt.f32.partialorder %v299, 0.0
        %vm306 = vcmp.gt.f32.partialorder %v301, 0.0
        %v307 = vmul.f32 %v293, 0.01
        %v308 = vmul.f32 %v295, 0.01
        %v309 = vmul.f32 %v299, 0.01
        %v310 = vmul.f32 %v301, 0.01
        %v311 = vsel %vm303, %v293, %v307
        %v312 = vsel %vm304, %v295, %v308
        %v313 = vsel %vm305, %v299, %v309
        %v314 = vsel %vm306, %v301, %v310
        %v315 = vld [vmem:[%s186] sm:$0xff]
        %316 = vmatprep.subr.mxu0 %v314
        %317 = vmatpush1.xpose.msra.mxu0 %v313
        %318 = vmatprep.subr.mxu0 0.0
        %319 = vmatpush1.xpose.msra.mxu0 0.0
        %320 = vmatprep.subr.mxu0 0.0
        %321 = vmatpush1.xpose.msra.mxu0 0.0
        %322 = vmatprep.subr.mxu0 0.0
        %323 = vmatpush1.xpose.msra.mxu0 0.0
        %324 = vmatprep.subr.mxu0 0.0
        %325 = vmatpush1.xpose.msra.mxu0 0.0
        %326 = vmatprep.subr.mxu0 0.0
        %327 = vmatpush1.xpose.msra.mxu0 0.0
        %328 = vmatprep.subr.mxu0 0.0
        %329 = vmatpush1.xpose.msra.mxu0 0.0
        %330 = vmatprep.subr.mxu0 0.0
        %331 = vmatpush1.xpose.msra.mxu0 0.0
        %332 = vmatprep.subr.mxu0 0.0
        %333 = vmatpush1.xpose.msra.mxu0 0.0
        %334 = vmatprep.subr.mxu0 0.0
        %335 = vmatpush1.xpose.msra.mxu0 0.0
        %336 = vmatprep.subr.mxu0 0.0
        %337 = vmatpush1.xpose.msra.mxu0 0.0
        %338 = vmatprep.subr.mxu0 0.0
        %339 = vmatpush1.xpose.msra.mxu0 0.0
        %340 = vmatprep.subr.mxu0 0.0
        %341 = vmatpush1.xpose.msra.mxu0 0.0
        %342 = vmatprep.subr.mxu0 0.0
        %343 = vmatpush1.xpose.msra.mxu0 0.0
        %344 = vmatprep.subr.mxu0 0.0
        %345 = vmatpush1.xpose.msra.mxu0 0.0
        %346 = vmatprep.subr.mxu0 0.0
        %347 = vmatpush1.xpose.msra.mxu0 0.0
        %348 = vmatprep.subr.mxu0 0.0
        %349 = vmatpush1.xpose.msra.mxu0 0.0
        %350 = vmatprep.subr.mxu0 0.0
        %351 = vmatpush1.xpose.msra.mxu0 0.0
        %352 = vmatprep.subr.mxu0 0.0
        %353 = vmatpush1.xpose.msra.mxu0 0.0
        %354 = vmatprep.subr.mxu0 0.0
        %355 = vmatpush1.xpose.msra.mxu0 0.0
        %356 = vmatprep.subr.mxu0 0.0
        %357 = vmatpush1.xpose.msra.mxu0 0.0
        %358 = vmatprep.subr.mxu0 0.0
        %359 = vmatpush1.xpose.msra.mxu0 0.0
        %360 = vmatprep.subr.mxu0 0.0
        %361 = vmatpush1.xpose.msra.mxu0 0.0
        %362 = vmatprep.subr.mxu0 0.0
        %363 = vmatpush1.xpose.msra.mxu0 0.0
        %364 = vmatprep.subr.mxu0 0.0
        %365 = vmatpush1.xpose.msra.mxu0 0.0
        %366 = vmatprep.subr.mxu0 0.0
        %367 = vmatpush1.xpose.msra.mxu0 0.0
        %368 = vmatprep.subr.mxu0 0.0
        %369 = vmatpush1.xpose.msra.mxu0 0.0
        %370 = vmatprep.subr.mxu0 0.0
        %371 = vmatpush1.xpose.msra.mxu0 0.0
        %372 = vmatprep.subr.mxu0 0.0
        %373 = vmatpush1.xpose.msra.mxu0 0.0
        %374 = vmatprep.subr.mxu0 0.0
        %375 = vmatpush1.xpose.msra.mxu0 0.0
        %376 = vmatprep.subr.mxu0 0.0
        %377 = vmatpush1.xpose.msra.mxu0 0.0
        %378 = vmatprep.subr.mxu0 0.0
        %379 = vmatpush1.xpose.msra.mxu0 0.0
        %380 = vmatprep.mubr.f32.mxu0 %v312
        %381 = vmatmul.mubr.f32.gmra.mrb[0].mxu0 %v311
        %v382 = vpop.f32.mrb[0].mxu0
        %v383 = vadd.f32 0.0, %v382
        %v384 = vpop.f32.mrb[0].mxu0
        %385 = vdwg.mxu0
        %v386 = vadd.f32 %v315, %v383
        %387 = vst.msk [vmem:[%s186] sm:$0xff] %vm219, %v386
        // Predicated region
        $region37: #{tpu_custom_call.1} parent=31 // pred_check
          %p388 = pneg %p197
        $region38: #{tpu_custom_call.1} parent=31 // pred_check_branch
          %390 = sbr.rel (%p388) target = $region40
        $region39: #{tpu_custom_call.1} parent=31 // pred_region
          %v391 = vld [vmem:[%s186] sm:$0xff]
          %v392 = vsel %vm219, %v391, -inf
          %v393 = vrot.slane %v392, 4
          %v394 = vmax.f32 %v392, %v393
          %v395 = vrot.slane %v394, 2
          %v396 = vmax.f32 %v394, %v395
          %v397 = vrot.slane %v396, 1
          %v398 = vmax.f32 %v396, %v397
          %v399 = vsub.f32 %v391, %v398
          %v400 = vmul.f32 %v399, 1.442695
          %v401 = vpow.pop %v400
          %v402 = vsel %vm219, %v401, 0.0
          %v403 = vrot.slane %v402, 4
          %v404 = vadd.f32 %v402, %v403
          %v405 = vrot.slane %v404, 2
          %v406 = vadd.f32 %v404, %v405
          %v407 = vrot.slane %v406, 1
          %v408 = vadd.f32 %v406, %v407
          %v409 = vrcp.pop %v408
          %v410 = vmul.f32 %v401, %v409
          %411 = vst.msk [vmem:[%s186] sm:$0xff] %vm219, %v410
        $region40: #{tpu_custom_call.1} parent=31 // pred_fallthru
          _
        %s412 = sand.u32 %s107, 1
        %s413 = scalar_lea.sflag [#allocation3], %s412
        %s414 = sand.u32 %s107, 1
        %s415 = smul.addr %s414, 8
        %s416 = scalar_lea.vmem [#allocation2], %s415
        // Predicated region
        $region41: #{tpu_custom_call.1} parent=31 // pred_check
          %p417 = pneg %p117
        $region42: #{tpu_custom_call.1} parent=31 // pred_check_branch
          %419 = sbr.rel (%p417) target = $region44
        $region43: #{tpu_custom_call.1} parent=31 // pred_region
          %s421 = ssub.s32 128, 128
          %422 = vsyncadd %s413, %s421
          %s423 = smul.addr %s21, 128
          %s424 = scalar_lea.hbm %s3, %s423
          %s426 = sshll.u32 %s416, 4
          %s427 = int_to_ptr.vmem [resolvable:$true] %s426
          %429 = dma.vmem_to_hbm [thread:$0]  %s427, 128, %s424, %s413
        $region44: #{tpu_custom_call.1} parent=31 // pred_fallthru
          _
      $region32: #{tpu_custom_call.1} parent=5 // pred_fallthru
        _
      %p430 = scmp.le.s32.totalorder 2, %s12
      // Predicated region
      $region45: #{tpu_custom_call.1} parent=5 // pred_check
        %p431 = pneg %p430
      $region46: #{tpu_custom_call.1} parent=5 // pred_check_branch
        %433 = sbr.rel (%p431) target = $region48
      $region47: #{tpu_custom_call.1} parent=5 // pred_region
        %s434 = ssub.s32 %s12, 2
        // Predicated region
        $region49: #{tpu_custom_call.1} parent=47 // pred_check
          %p435 = pneg %p123
        $region50: #{tpu_custom_call.1} parent=47 // pred_check_branch
          %437 = sbr.rel (%p435) target = $region52
        $region51: #{tpu_custom_call.1} parent=47 // pred_region
          %s438 = sand.u32 %s108, 1
          %s439 = scalar_lea.sflag [#allocation3], %s438
          %s440 = sand.u32 %s108, 1
          %s441 = smul.addr %s440, 8
          %s442 = scalar_lea.vmem [#allocation2], %s441
          %443 = dma.done %s439, 128
        $region52: #{tpu_custom_call.1} parent=47 // pred_fallthru
          _
      $region48: #{tpu_custom_call.1} parent=5 // pred_fallthru
        _
    $region6: #{tpu_custom_call.1} parent=1 // loop_footer
      %s16 = sadd.s32 1, %s12
    $region7: #{tpu_custom_call.1} parent=1 // loop_footer_branch
      %11 = sbr.rel target = $region3
    $region8: #{tpu_custom_call.1} parent=1 // loop_exit
      _
    %444 = vsyncpa [#allocation3], 1
    %s445 = scalar_lea.sflag [#allocation3], 1
    %446 = vsyncpa %s445, 1

</llo_original>
